<compile_context>
chip_gen: v7x
topology: tpu7x:2x2x1
jax: 0.10.0
libtpu: 0.0.40
codegen_flags: <defaults>
</compile_context>

<pallas_src>
from functools import partial

import jax
import jax.numpy as jnp
from jax.experimental import pallas as pl
from jax.experimental.pallas import tpu as pltpu


def _round_up(v, m):
    return (v + m - 1) // m * m


def _padded_bytes(rows, cols, itemsize):
    return _round_up(max(rows, 1), 8) * _round_up(max(cols, 1), 128) * itemsize


# --------------------------------------------------------------------------- #
# Pallas kernel: banded, K-tiled relu(A @ XW + b1) followed by P_tile @ h
# --------------------------------------------------------------------------- #
def gcn_band_kernel(col_start_ref, n_cols_ref,       # scalar prefetch (SMEM)
                    a_ref, xw_ref, p_ref, b1_ref,    # VMEM input tiles
                    part_ref,                        # out: (1, G, H) pooled partial
                    h_ref):                          # scratch: (tile, H) f32
    i = pl.program_id(0)          # row tile (parallel)
    k = pl.program_id(1)          # column tile within this row's band (arbitrary)
    nk = n_cols_ref[i]            # number of non-zero column tiles for this row tile

    @pl.when(k == 0)
    def _init():
        h_ref[...] = jnp.zeros_like(h_ref)

    @pl.when(k < nk)
    def _accumulate():
        # h_tile += A[row_tile, band_col_tile] @ XW[band_col_tile]  (f32 MXU acc)
        h_ref[...] += jnp.dot(a_ref[...], xw_ref[...],
                              preferred_element_type=jnp.float32)

    @pl.when(k == nk - 1)
    def _finalize_row_tile():
        h = jnp.maximum(h_ref[...] + b1_ref[...], 0.0)
        # Per-row-tile pooled partial; summed over row tiles in XLA afterwards.
        part_ref[...] = jnp.dot(p_ref[...], h,
                                preferred_element_type=jnp.float32)[None]


# --------------------------------------------------------------------------- #
# JAX glue: graph densification
# --------------------------------------------------------------------------- #
def build_normalized_adjacency(edge_index, edge_weights, num_nodes):
    """Dense A_hat[t, s] = d^-1/2[t] * w * d^-1/2[s], with self loops (weight 1).

    Note: if edge_index already contains self loops their weights sum with the +1.0
    self-loop term (scatter-add semantics); matches the intended PyG config for
    graphs without explicit self loops.
    """
    src = edge_index[0]
    dst = edge_index[1]
    a = jnp.zeros((num_nodes, num_nodes), jnp.float32)
    a = a.at[dst, src].add(edge_weights.astype(jnp.float32))
    idx = jnp.arange(num_nodes)
    a = a.at[idx, idx].add(1.0)
    deg = jnp.sum(a, axis=1)
    dinv = jnp.where(deg > 0, jax.lax.rsqrt(deg), 0.0)
    return dinv[:, None] * a * dinv[None, :]


def build_mean_pool_matrix(batch, num_graphs, num_nodes):
    onehot = (batch[None, :] == jnp.arange(num_graphs)[:, None]).astype(jnp.float32)
    counts = jnp.maximum(jnp.sum(onehot, axis=1, keepdims=True), 1.0)
    return onehot / counts  # (G, N)


# --------------------------------------------------------------------------- #
# Forward pass
# --------------------------------------------------------------------------- #
@partial(jax.jit,
         static_argnames=("num_graphs", "num_classes", "tile_n", "max_band_tiles"))
def simple_gcn_forward(x, edge_index, edge_weights, batch, params, *,
                       num_graphs, num_classes, tile_n=512, max_band_tiles=None):
    w1, b1, w2, b2 = params
    n_nodes, _ = x.shape
    hidden = w1.shape[1]

    if tile_n % 128 != 0:
        raise ValueError("tile_n must be a multiple of 128 (8,128 tiling rule).")

    tile = min(tile_n, _round_up(n_nodes, 128))
    n_pad = _round_up(n_nodes, tile)
    pad = n_pad - n_nodes
    nt = n_pad // tile
    # Static upper bound on the band width (column tiles per row tile). Default is
    # fully general (nt); callers may pass a smaller static bound they can guarantee.
    kmax = nt if max_band_tiles is None else max(1, min(nt, int(max_band_tiles)))

    # Dense normalized adjacency (bf16 halves the dominant HBM stream) + pool matrix.
    a_hat = build_normalized_adjacency(edge_index, edge_weights, n_nodes)
    a_bf16 = jnp.pad(a_hat, ((0, pad), (0, pad))).astype(jnp.bfloat16)
    p_pad = jnp.pad(build_mean_pool_matrix(batch, num_graphs, n_nodes),
                    ((0, 0), (0, pad)))                      # zero weight for pads

    # XW precomputed in XLA (negligible cost), streamed into the kernel in bf16.
    xw_bf16 = jnp.pad(x.astype(jnp.float32) @ w1, ((0, pad), (0, 0))).astype(jnp.bfloat16)

    # Per-row-tile non-zero column-tile band, straight from edge_index (O(E)).
    src, dst = edge_index[0], edge_index[1]
    mask = jnp.zeros((nt, nt), jnp.bool_)
    mask = mask.at[dst // tile, src // tile].set(True)
    diag = jnp.arange(nt)
    mask = mask.at[diag, diag].set(True)     # self loops: every row tile has real nodes
    col_start = jnp.argmax(mask, axis=1).astype(jnp.int32)
    col_last = (nt - 1 - jnp.argmax(mask[:, ::-1], axis=1)).astype(jnp.int32)
    n_cols = jnp.minimum(col_last - col_start + 1, kmax).astype(jnp.int32)

    # Outside the band: repeat the last valid block index (pipeline elides the DMA).
    def a_index(i, k, cs, nc):
        return (i, cs[i] + jnp.minimum(k, nc[i] - 1))

    def xw_index(i, k, cs, nc):
        return (cs[i] + jnp.minimum(k, nc[i] - 1), 0)

    footprint = (
        2 * (_padded_bytes(tile, tile, 2)            # A band tile (bf16, dbl-buffered)
             + _padded_bytes(tile, hidden, 2)        # XW tile
             + _padded_bytes(num_graphs, tile, 4)    # P row-tile columns
             + _padded_bytes(1, hidden, 4)           # b1
             + _padded_bytes(num_graphs, hidden, 4)) # out partial
        + _padded_bytes(tile, hidden, 4)             # h scratch
    )
    vmem_bytes = max(32 << 20, min(footprint + (8 << 20), 48 << 20))  # <= v7x physical

    partials = pl.pallas_call(
        gcn_band_kernel,
        out_shape=jax.ShapeDtypeStruct((nt, num_graphs, hidden), jnp.float32),
        grid_spec=pltpu.PrefetchScalarGridSpec(
            num_scalar_prefetch=2,
            grid=(nt, kmax),
            in_specs=[
                pl.BlockSpec((tile, tile), a_index),                            # A band
                pl.BlockSpec((tile, hidden), xw_index),                         # XW
                pl.BlockSpec((num_graphs, tile), lambda i, k, cs, nc: (0, i)),  # P cols
                pl.BlockSpec((1, hidden), lambda i, k, cs, nc: (0, 0)),         # b1
            ],
            out_specs=pl.BlockSpec((1, num_graphs, hidden),
                                   lambda i, k, cs, nc: (i, 0, 0)),
            scratch_shapes=[pltpu.VMEM((tile, hidden), jnp.float32)],
        ),
        compiler_params=pltpu.CompilerParams(
            # Row tiles are independent (shards across v7x's 2 TCs); the column-tile
            # axis is the in-kernel reduction.
            dimension_semantics=("parallel", "arbitrary"),
            vmem_limit_bytes=vmem_bytes,
        ),
    )(col_start, n_cols, a_bf16, xw_bf16, p_pad, b1)

    pooled = jnp.sum(partials, axis=0)    # (G, hidden)
    out = pooled @ w2 + b2                # tiny Linear head in XLA
    if num_classes == 1:
        return out.reshape(-1)            # matches torch .view(-1)
    return out


# --------------------------------------------------------------------------- #
# Demo / correctness check
# --------------------------------------------------------------------------- #
def _build_example(key, graph_sizes, num_features, edges_per_graph):
    """Deterministic batched graph: random intra-graph edges, PyG-style batch vector."""
    n_total = int(sum(graph_sizes))
    k_x, k_e, k_w = jax.random.split(key, 3)
    x = jax.random.normal(k_x, (n_total, num_features), jnp.float32)
    ek = jax.random.split(k_e, 2 * len(graph_sizes))
    srcs, dsts, offset = [], [], 0
    for gi, sz in enumerate(graph_sizes):
        srcs.append(jax.random.randint(ek[2 * gi], (edges_per_graph,), 0, sz) + offset)
        dsts.append(jax.random.randint(ek[2 * gi + 1], (edges_per_graph,), 0, sz) + offset)
        offset += sz
    edge_index = jnp.stack([jnp.concatenate(srcs),
                            jnp.concatenate(dsts)]).astype(jnp.int32)
    edge_weights = jax.random.uniform(k_w, (edge_index.shape[1],), jnp.float32, 0.1, 1.0)
    batch = jnp.concatenate(
        [jnp.full((sz,), gi, jnp.int32) for gi, sz in enumerate(graph_sizes)])
    return x, edge_index, edge_weights, batch


if __name__ == "__main__":
    NUM_NODE_FEATURES = 16
    HIDDEN = NUM_NODE_FEATURES // 2
    NUM_CLASSES = 3

    key = jax.random.PRNGKey(0)
    k_params, k_g1, k_g2 = jax.random.split(key, 3)
    k_w1, k_b1, k_w2, k_b2 = jax.random.split(k_params, 4)

    # Deterministic parameter init (Glorot-ish), stored (in, out).
    w1 = jax.random.normal(k_w1, (NUM_NODE_FEATURES, HIDDEN), jnp.float32) / jnp.sqrt(
        float(NUM_NODE_FEATURES))
    b1 = jax.random.normal(k_b1, (1, HIDDEN), jnp.float32) * 0.01
    w2 = jax.random.normal(k_w2, (HIDDEN, NUM_CLASSES), jnp.float32) / jnp.sqrt(float(HIDDEN))
    b2 = jax.random.normal(k_b2, (1, NUM_CLASSES), jnp.float32) * 0.01
    params = (w1, b1, w2, b2)

    def references(x, ei, ew, batch, num_graphs):
        a_hat = build_normalized_adjacency(ei, ew, x.shape[0])
        p = build_mean_pool_matrix(batch, num_graphs, x.shape[0])
        # (a) pure f32 reference (loose tolerance: kernel streams A / XW in bf16).
        h = jnp.maximum(a_hat @ (x @ w1) + b1, 0.0)
        ref_f32 = (p @ h) @ w2 + b2
        # (b) reference mirroring the kernel's bf16 quantization (tight tolerance).
        a_q = a_hat.astype(jnp.bfloat16).astype(jnp.float32)
        xw_q = (x @ w1).astype(jnp.bfloat16).astype(jnp.float32)
        h_q = jnp.maximum(a_q @ xw_q + b1, 0.0)
        ref_q = (p @ h_q) @ w2 + b2
        return ref_f32, ref_q

    def check(x, ei, ew, batch, num_graphs, **kw):
        out = simple_gcn_forward(x, ei, ew, batch, params,
                                 num_graphs=num_graphs, num_classes=NUM_CLASSES, **kw)
        out = jax.block_until_ready(out)
        ref_f32, ref_q = references(x, ei, ew, batch, num_graphs)
        assert out.shape == (num_graphs, NUM_CLASSES)
        assert jnp.allclose(out, ref_q, atol=2e-3, rtol=2e-3)
        assert jnp.allclose(out, ref_f32, atol=5e-2, rtol=5e-2)

    # Test 1: tiny problem (2 graphs x 8 nodes, 16 features) -- single tile / band.
    x1, ei1, ew1, b1v = _build_example(k_g1, (8, 8), NUM_NODE_FEATURES, 12)
    check(x1, ei1, ew1, b1v, num_graphs=2)

    # Test 2: multi-tile banded path (graphs straddle 128-row tiles, variable band
    # widths, zero-block column tiles skipped).
    x2, ei2, ew2, b2v = _build_example(k_g2, (100, 150, 70), NUM_NODE_FEATURES, 200)
    check(x2, ei2, ew2, b2v, num_graphs=3, tile_n=128)

    print("KERNEL_OK")
</pallas_src>

<mosaic_0001>
module attributes {stable_mosaic.version = 11 : i64} {
  func.func private @main(%arg0: i32) attributes {dimension_semantics = [#tpu.dimension_semantics<core_parallel>], iteration_bounds = array<i64: 2>, tpu.core_type = #tpu.core_type<sc_scalar_subcore>, window_params = []} {
    return
  }
}

module attributes {stable_mosaic.version = 11 : i64} {
  func.func private @main(%arg0: i32) attributes {dimension_semantics = [#tpu.dimension_semantics<core_parallel>], iteration_bounds = array<i64: 2>, tpu.core_type = #tpu.core_type<sc_scalar_subcore>, window_params = []} {
    return
  }
}

module attributes {stable_mosaic.version = 11 : i64} {
  func.func @gcn_band_kernel(%arg0: i32, %arg1: i32, %arg2: memref<1xi32, #tpu.memory_space<smem>>, %arg3: memref<1xi32, #tpu.memory_space<smem>>, %arg4: memref<128x128xbf16, #tpu.memory_space<vmem>>, %arg5: memref<128x8xbf16, #tpu.memory_space<vmem>>, %arg6: memref<2x128xf32, #tpu.memory_space<vmem>>, %arg7: memref<1x8xf32, #tpu.memory_space<vmem>>, %arg8: memref<1x2x8xf32, #tpu.memory_space<vmem>>, %arg9: memref<128x8xf32, #tpu.memory_space<vmem>>) attributes {dimension_semantics = [#tpu.dimension_semantics<parallel>, #tpu.dimension_semantics<arbitrary>], iteration_bounds = array<i64: 1, 1>, scalar_prefetch = 2 : i64, scratch_operands = 1 : i64, tpu.core_type = #tpu.core_type<tc>, window_params = [{transform_indices = @transform_0, window_bounds = array<i64: 128, 128>}, {transform_indices = @transform_1, window_bounds = array<i64: 128, 8>}, {transform_indices = @transform_2, window_bounds = array<i64: 2, 128>}, {pipeline_mode = #tpu.pipeline_mode<synchronous>, transform_indices = @transform_3, window_bounds = array<i64: 1, 8>}, {transform_indices = @transform_4, window_bounds = array<i64: 1, 2, 8>}]} {
    %0 = arith.index_cast %arg0 : i32 to index
    %1 = memref.load %arg3[%0] : memref<1xi32, #tpu.memory_space<smem>>
    %c0_i32 = arith.constant 0 : i32
    %2 = arith.cmpi eq, %arg1, %c0_i32 : i32
    %3 = arith.extui %2 : i1 to i32
    %c0_i32_0 = arith.constant 0 : i32
    %4 = arith.cmpi ne, %3, %c0_i32_0 : i32
    scf.if %4 {
      %cst = arith.constant 0.000000e+00 : f32
      %12 = vector.broadcast %cst : f32 to vector<128x8xf32>
      %c0 = arith.constant 0 : index
      %c0_3 = arith.constant 0 : index
      %13 = vector.load %arg9[%c0, %c0_3] : memref<128x8xf32, #tpu.memory_space<vmem>>, vector<128x8xf32>
      tpu.vector_store %arg9[%c0, %c0_3], %12 {strides = array<i32>} : memref<128x8xf32, #tpu.memory_space<vmem>>, vector<128x8xf32>,
    } else {
    }
    %5 = arith.cmpi slt, %arg1, %1 : i32
    %6 = arith.extui %5 : i1 to i32
    %c0_i32_1 = arith.constant 0 : i32
    %7 = arith.cmpi ne, %6, %c0_i32_1 : i32
    scf.if %7 {
      %c0 = arith.constant 0 : index
      %c0_3 = arith.constant 0 : index
      %12 = vector.load %arg9[%c0, %c0_3] : memref<128x8xf32, #tpu.memory_space<vmem>>, vector<128x8xf32>
      %c0_4 = arith.constant 0 : index
      %c0_5 = arith.constant 0 : index
      %13 = vector.load %arg4[%c0_4, %c0_5] : memref<128x128xbf16, #tpu.memory_space<vmem>>, vector<128x128xbf16>
      %c0_6 = arith.constant 0 : index
      %c0_7 = arith.constant 0 : index
      %14 = vector.load %arg5[%c0_6, %c0_7] : memref<128x8xbf16, #tpu.memory_space<vmem>>, vector<128x8xbf16>
      %cst = arith.constant dense<0.000000e+00> : vector<128x8xf32>
      %15 = tpu.matmul %13, %14, %cst {dimension_numbers = #tpu.dot_dimension_numbers<[1], [0], [0], [1], [0, 0, 1, 1], [], []>} : vector<128x128xbf16>, vector<128x8xbf16>, vector<128x8xf32> -> vector<128x8xf32>
      %16 = arith.addf %12, %15 : vector<128x8xf32>
      %c0_8 = arith.constant 0 : index
      %c0_9 = arith.constant 0 : index
      %17 = vector.load %arg9[%c0_8, %c0_9] : memref<128x8xf32, #tpu.memory_space<vmem>>, vector<128x8xf32>
      tpu.vector_store %arg9[%c0_8, %c0_9], %16 {strides = array<i32>} : memref<128x8xf32, #tpu.memory_space<vmem>>, vector<128x8xf32>,
    } else {
    }
    %c1_i32 = arith.constant 1 : i32
    %8 = arith.subi %1, %c1_i32 : i32
    %9 = arith.cmpi eq, %arg1, %8 : i32
    %10 = arith.extui %9 : i1 to i32
    %c0_i32_2 = arith.constant 0 : i32
    %11 = arith.cmpi ne, %10, %c0_i32_2 : i32
    scf.if %11 {
      %c0 = arith.constant 0 : index
      %c0_3 = arith.constant 0 : index
      %12 = vector.load %arg9[%c0, %c0_3] : memref<128x8xf32, #tpu.memory_space<vmem>>, vector<128x8xf32>
      %c0_4 = arith.constant 0 : index
      %c0_5 = arith.constant 0 : index
      %13 = vector.load %arg7[%c0_4, %c0_5] : memref<1x8xf32, #tpu.memory_space<vmem>>, vector<1x8xf32>
      %14 = vector.broadcast %13 : vector<1x8xf32> to vector<128x8xf32>
      %15 = arith.addf %12, %14 : vector<128x8xf32>
      %cst = arith.constant 0.000000e+00 : f32
      %16 = vector.broadcast %cst : f32 to vector<128x8xf32>
      %17 = arith.maximumf %15, %16 : vector<128x8xf32>
      %c0_6 = arith.constant 0 : index
      %c0_7 = arith.constant 0 : index
      %18 = vector.load %arg6[%c0_6, %c0_7] : memref<2x128xf32, #tpu.memory_space<vmem>>, vector<2x128xf32>
      %cst_8 = arith.constant dense<0.000000e+00> : vector<2x8xf32>
      %19 = tpu.matmul %18, %17, %cst_8 {dimension_numbers = #tpu.dot_dimension_numbers<[1], [0], [0], [1], [0, 0, 1, 1], [], []>} : vector<2x128xf32>, vector<128x8xf32>, vector<2x8xf32> -> vector<2x8xf32>
      %20 = vector.shape_cast %19 : vector<2x8xf32> to vector<1x2x8xf32>
      %c0_9 = arith.constant 0 : index
      %c0_10 = arith.constant 0 : index
      %c0_11 = arith.constant 0 : index
      %21 = vector.load %arg8[%c0_9, %c0_10, %c0_11] : memref<1x2x8xf32, #tpu.memory_space<vmem>>, vector<1x2x8xf32>
      tpu.vector_store %arg8[%c0_9, %c0_10, %c0_11], %20 {strides = array<i32>} : memref<1x2x8xf32, #tpu.memory_space<vmem>>, vector<1x2x8xf32>,
    } else {
    }
    return
  }
  func.func @transform_0(%arg0: i32, %arg1: i32, %arg2: memref<1xi32, #tpu.memory_space<smem>>, %arg3: memref<1xi32, #tpu.memory_space<smem>>) -> (i32, i32) {
    %0 = arith.index_cast %arg0 : i32 to index
    %1 = memref.load %arg2[%0] : memref<1xi32, #tpu.memory_space<smem>>
    %2 = arith.index_cast %arg0 : i32 to index
    %3 = memref.load %arg3[%2] : memref<1xi32, #tpu.memory_space<smem>>
    %c1_i32 = arith.constant 1 : i32
    %4 = arith.subi %3, %c1_i32 : i32
    %5 = arith.minsi %arg1, %4 : i32
    %6 = arith.addi %1, %5 : i32
    %c0_i32 = arith.constant 0 : i32
    return %arg0, %6 : i32, i32
  }
  func.func @transform_1(%arg0: i32, %arg1: i32, %arg2: memref<1xi32, #tpu.memory_space<smem>>, %arg3: memref<1xi32, #tpu.memory_space<smem>>) -> (i32, i32) {
    %0 = arith.index_cast %arg0 : i32 to index
    %1 = memref.load %arg2[%0] : memref<1xi32, #tpu.memory_space<smem>>
    %2 = arith.index_cast %arg0 : i32 to index
    %3 = memref.load %arg3[%2] : memref<1xi32, #tpu.memory_space<smem>>
    %c1_i32 = arith.constant 1 : i32
    %4 = arith.subi %3, %c1_i32 : i32
    %5 = arith.minsi %arg1, %4 : i32
    %6 = arith.addi %1, %5 : i32
    %c0_i32 = arith.constant 0 : i32
    %c0_i32_0 = arith.constant 0 : i32
    return %6, %c0_i32 : i32, i32
  }
  func.func @transform_2(%arg0: i32, %arg1: i32, %arg2: memref<1xi32, #tpu.memory_space<smem>>, %arg3: memref<1xi32, #tpu.memory_space<smem>>) -> (i32, i32) {
    %c0_i32 = arith.constant 0 : i32
    %c0_i32_0 = arith.constant 0 : i32
    return %c0_i32, %arg0 : i32, i32
  }
  func.func @transform_3(%arg0: i32, %arg1: i32, %arg2: memref<1xi32, #tpu.memory_space<smem>>, %arg3: memref<1xi32, #tpu.memory_space<smem>>) -> (i32, i32) {
    %c0_i32 = arith.constant 0 : i32
    %c0_i32_0 = arith.constant 0 : i32
    %c0_i32_1 = arith.constant 0 : i32
    return %c0_i32, %c0_i32_0 : i32, i32
  }
  func.func @transform_4(%arg0: i32, %arg1: i32, %arg2: memref<1xi32, #tpu.memory_space<smem>>, %arg3: memref<1xi32, #tpu.memory_space<smem>>) -> (i32, i32, i32) {
    %c0_i32 = arith.constant 0 : i32
    %c0_i32_0 = arith.constant 0 : i32
    %c0_i32_1 = arith.constant 0 : i32
    return %arg0, %c0_i32, %c0_i32_0 : i32, i32, i32
  }
}

</mosaic_0001>

<llo_original>
// kernel: simple_gcn_forward.1
$region0: #{simple_gcn_forward.1}
  #allocation0 [shape = 'u32[]', space=smem, size = 0x4, offset = 0x4, fixed_abs, tag = 'smem constant byte address 0x4 - core index']
  #allocation1 [shape = 'u32[144,128]{1,0:T(1,128)}', space=vmem, size = 0x12000, scoped, tag = 'internal scratch']
  #allocation2 [shape = 'f32[128,8]{1,0:T(8,128)}', space=vmem, size = 0x10000, scoped, tag = 'scratch operand']
  #allocation3 [shape = 's32[1]{0}', space=sflag, size = 0x4, scoped, tag = 'scoped memory for simple_gcn_forward.1']
  #allocation4 [shape = 's32[1]{0:T(128)S(6)}', space=smem, size = 0x200, scoped, tag = 'prefetched SMEM operand 0']
  #allocation5 [shape = 's32[1]{0:T(128)S(6)}', space=smem, size = 0x200, scoped, tag = 'prefetched SMEM operand 1']
  %s0 = inlined_call_operand.<no memory space> [shape: s32[1], index: 0, kind: input, shape index: {}]
  %s1 = inlined_call_operand.<no memory space> [shape: s32[1], index: 1, kind: input, shape index: {}]
  %s2 = inlined_call_operand.vmem [shape: bf16[128,128], index: 2, kind: input, shape index: {}]
  %s3 = inlined_call_operand.vmem [shape: bf16[128,8], index: 3, kind: input, shape index: {}]
  %s4 = inlined_call_operand.vmem [shape: f32[2,128], index: 4, kind: input, shape index: {}]
  %s5 = inlined_call_operand.vmem [shape: f32[1,8], index: 5, kind: input, shape index: {}]
  %s6 = inlined_call_operand.vmem [shape: f32[1,2,8], index: 6, kind: output, shape index: {}]
  %s7 = sld [smem:[#allocation0]]
  $region38: #{simple_gcn_forward.1} parent=0
    _
  %s9 = ssub.s32 1, %s7
  %s10 = scalar_select 0, %s9, %s7
  %11 = sst [smem:[#allocation4]] %s0
  %12 = sst [smem:[#allocation5]] %s1
  // Predicated region
  $region2: #{simple_gcn_forward.1} parent=0 // pred_check
    _
  $region3: #{simple_gcn_forward.1} parent=0 // pred_check_branch
    %14 = sbr.rel (0) target = $region5
  $region4: #{simple_gcn_forward.1} parent=0 // pred_region
    %s15 = sld [smem:[#allocation4]]
    %s16 = sld [smem:[#allocation5]]
    %s17 = ssub.s32 %s16, 1
    %p18 = scmp.lt.s32.totalorder 0, %s17
    %s19 = scalar_select %p18, 0, %s17
    %s20 = sadd.s32 %s15, %s19
    %p21 = scmp.lt.s32.totalorder %s20, 0
    %s22 = scalar_select %p21, %s20, 0
    %s23 = smul.addr %s22, 4
    %s24 = scalar_lea.vmem %s2, %s23
    %s25 = sld [smem:[#allocation4]]
    %s26 = sld [smem:[#allocation5]]
    %s27 = ssub.s32 %s26, 1
    %p28 = scmp.lt.s32.totalorder 0, %s27
    %s29 = scalar_select %p28, 0, %s27
    %s30 = sadd.s32 %s25, %s29
  $region5: #{simple_gcn_forward.1} parent=0 // pred_fallthru
    _
  // Predicated region
  $region6: #{simple_gcn_forward.1} parent=0 // pred_check
    _
  $region7: #{simple_gcn_forward.1} parent=0 // pred_check_branch
    %32 = sbr.rel (0) target = $region9
  $region8: #{simple_gcn_forward.1} parent=0 // pred_region
    %s33 = sld [smem:[#allocation4]]
    %s34 = sld [smem:[#allocation5]]
    %s35 = ssub.s32 %s34, 1
    %p36 = scmp.lt.s32.totalorder 0, %s35
    %s37 = scalar_select %p36, 0, %s35
    %s38 = sadd.s32 %s33, %s37
    %s39 = smul.u32 16, %s38
    %p40 = scmp.lt.s32.totalorder %s39, 15
    %s41 = scalar_select %p40, %s39, 15
    %s42 = smul.addr %s41, 4
    %s43 = scalar_lea.vmem %s3, %s42
    %s44 = sld [smem:[#allocation4]]
    %s45 = sld [smem:[#allocation5]]
    %s46 = ssub.s32 %s45, 1
    %p47 = scmp.lt.s32.totalorder 0, %s46
    %s48 = scalar_select %p47, 0, %s46
    %s49 = sadd.s32 %s44, %s48
    %s50 = smul.u32 16, %s49
  $region9: #{simple_gcn_forward.1} parent=0 // pred_fallthru
    _
  // Predicated region
  $region10: #{simple_gcn_forward.1} parent=0 // pred_check
    _
  $region11: #{simple_gcn_forward.1} parent=0 // pred_check_branch
    %52 = sbr.rel (0) target = $region13
  $region12: #{simple_gcn_forward.1} parent=0 // pred_region
    _
  $region13: #{simple_gcn_forward.1} parent=0 // pred_fallthru
    _
  // Predicated region
  $region14: #{simple_gcn_forward.1} parent=0 // pred_check
    _
  $region15: #{simple_gcn_forward.1} parent=0 // pred_check_branch
    %54 = sbr.rel (0) target = $region17
  $region16: #{simple_gcn_forward.1} parent=0 // pred_region
    _
  $region17: #{simple_gcn_forward.1} parent=0 // pred_fallthru
    _
  %s55 = sld [smem:[#allocation4]]
  %s56 = sld [smem:[#allocation5]]
  %s57 = ssub.s32 %s56, 1
  %p58 = scmp.lt.s32.totalorder 0, %s57
  %s59 = scalar_select %p58, 0, %s57
  %s60 = sadd.s32 %s55, %s59
  %p61 = scmp.lt.s32.totalorder %s60, 0
  %s62 = scalar_select %p61, %s60, 0
  %s63 = smul.addr %s62, 4
  %s64 = scalar_lea.vmem %s2, %s63
  %s65 = sld [smem:[#allocation4]]
  %s66 = sld [smem:[#allocation5]]
  %s67 = ssub.s32 %s66, 1
  %p68 = scmp.lt.s32.totalorder 0, %s67
  %s69 = scalar_select %p68, 0, %s67
  %s70 = sadd.s32 %s65, %s69
  %s71 = smul.u32 16, %s70
  %p72 = scmp.lt.s32.totalorder %s71, 15
  %s73 = scalar_select %p72, %s71, 15
  %s74 = smul.addr %s73, 4
  %s75 = scalar_lea.vmem %s3, %s74
  %s76 = sld [smem:[#allocation4]]
  %s77 = sld [smem:[#allocation5]]
  %s78 = ssub.s32 %s77, 1
  %p79 = scmp.lt.s32.totalorder 0, %s78
  %s80 = scalar_select %p79, 0, %s78
  %s81 = sadd.s32 %s76, %s80
  %p82 = scmp.lt.s32.totalorder %s81, 0
  %s83 = scalar_select %p82, %s81, 0
  %s84 = smul.addr %s83, 4
  %s85 = scalar_lea.vmem %s2, %s84
  %s86 = sld [smem:[#allocation4]]
  %s87 = sld [smem:[#allocation5]]
  %s88 = ssub.s32 %s87, 1
  %p89 = scmp.lt.s32.totalorder 0, %s88
  %s90 = scalar_select %p89, 0, %s88
  %s91 = sadd.s32 %s86, %s90
  %s92 = sld [smem:[#allocation4]]
  %s93 = sld [smem:[#allocation5]]
  %s94 = ssub.s32 %s93, 1
  %p95 = scmp.lt.s32.totalorder 0, %s94
  %s96 = scalar_select %p95, 0, %s94
  %s97 = sadd.s32 %s92, %s96
  %s98 = smul.u32 16, %s97
  %p99 = scmp.lt.s32.totalorder %s98, 15
  %s100 = scalar_select %p99, %s98, 15
  %s101 = smul.addr %s100, 4
  %s102 = scalar_lea.vmem %s3, %s101
  %s103 = sld [smem:[#allocation4]]
  %s104 = sld [smem:[#allocation5]]
  %s105 = ssub.s32 %s104, 1
  %p106 = scmp.lt.s32.totalorder 0, %s105
  %s107 = scalar_select %p106, 0, %s105
  %s108 = sadd.s32 %s103, %s107
  %s109 = smul.u32 16, %s108
  %s111 = sld [smem:[#allocation5]]
  %p112 = scmp.eq.s32.totalorder 0, 0
  // Predicated region
  $region18: #{simple_gcn_forward.1} parent=0 // pred_check
    %p113 = pneg %p112
  $region19: #{simple_gcn_forward.1} parent=0 // pred_check_branch
    %115 = sbr.rel (%p113) target = $region21
  $region20: #{simple_gcn_forward.1} parent=0 // pred_region
    %vm116 = vcmask 64512
    %117 = vst.msk [vmem:[#allocation2] sm:$0xff] %vm116, 0.0
    %118 = vst.msk [vmem:[#allocation2 + $0x8] sm:$0xff] %vm116, 0.0
    %119 = vst.msk [vmem:[#allocation2 + $0x10] sm:$0xff] %vm116, 0.0
    %120 = vst.msk [vmem:[#allocation2 + $0x18] sm:$0xff] %vm116, 0.0
    %121 = vst.msk [vmem:[#allocation2 + $0x20] sm:$0xff] %vm116, 0.0
    %122 = vst.msk [vmem:[#allocation2 + $0x28] sm:$0xff] %vm116, 0.0
    %123 = vst.msk [vmem:[#allocation2 + $0x30] sm:$0xff] %vm116, 0.0
    %124 = vst.msk [vmem:[#allocation2 + $0x38] sm:$0xff] %vm116, 0.0
    %125 = vst.msk [vmem:[#allocation2 + $0x40] sm:$0xff] %vm116, 0.0
    %126 = vst.msk [vmem:[#allocation2 + $0x48] sm:$0xff] %vm116, 0.0
    %127 = vst.msk [vmem:[#allocation2 + $0x50] sm:$0xff] %vm116, 0.0
    %128 = vst.msk [vmem:[#allocation2 + $0x58] sm:$0xff] %vm116, 0.0
    %129 = vst.msk [vmem:[#allocation2 + $0x60] sm:$0xff] %vm116, 0.0
    %130 = vst.msk [vmem:[#allocation2 + $0x68] sm:$0xff] %vm116, 0.0
    %131 = vst.msk [vmem:[#allocation2 + $0x70] sm:$0xff] %vm116, 0.0
    %132 = vst.msk [vmem:[#allocation2 + $0x78] sm:$0xff] %vm116, 0.0
  $region21: #{simple_gcn_forward.1} parent=0 // pred_fallthru
    _
  %p133 = scmp.lt.s32.totalorder 0, %s111
  // Predicated region
  $region22: #{simple_gcn_forward.1} parent=0 // pred_check
    %p134 = pneg %p133
  $region23: #{simple_gcn_forward.1} parent=0 // pred_check_branch
    %136 = sbr.rel (%p134) target = $region25
  $region24: #{simple_gcn_forward.1} parent=0 // pred_region
    %v137 = vld [vmem:[#allocation2] sm:$0xff]
    %v138 = vld [vmem:[#allocation2 + $0x8] sm:$0xff]
    %v139 = vld [vmem:[#allocation2 + $0x10] sm:$0xff]
    %v140 = vld [vmem:[#allocation2 + $0x18] sm:$0xff]
    %v141 = vld [vmem:[#allocation2 + $0x20] sm:$0xff]
    %v142 = vld [vmem:[#allocation2 + $0x28] sm:$0xff]
    %v143 = vld [vmem:[#allocation2 + $0x30] sm:$0xff]
    %v144 = vld [vmem:[#allocation2 + $0x38] sm:$0xff]
    %v145 = vld [vmem:[#allocation2 + $0x40] sm:$0xff]
    %v146 = vld [vmem:[#allocation2 + $0x48] sm:$0xff]
    %v147 = vld [vmem:[#allocation2 + $0x50] sm:$0xff]
    %v148 = vld [vmem:[#allocation2 + $0x58] sm:$0xff]
    %v149 = vld [vmem:[#allocation2 + $0x60] sm:$0xff]
    %v150 = vld [vmem:[#allocation2 + $0x68] sm:$0xff]
    %v151 = vld [vmem:[#allocation2 + $0x70] sm:$0xff]
    %v152 = vld [vmem:[#allocation2 + $0x78] sm:$0xff]
    %v153 = vld [vmem:[%s85] sm:$0xf]
    %v154 = vld [vmem:[%s85 + $0x4] sm:$0xf]
    %v155 = vld [vmem:[%s85 + $0x8] sm:$0xf]
    %v156 = vld [vmem:[%s85 + $0xc] sm:$0xf]
    %v157 = vld [vmem:[%s85 + $0x10] sm:$0xf]
    %v158 = vld [vmem:[%s85 + $0x14] sm:$0xf]
    %v159 = vld [vmem:[%s85 + $0x18] sm:$0xf]
    %v160 = vld [vmem:[%s85 + $0x1c] sm:$0xf]
    %v161 = vld [vmem:[%s85 + $0x20] sm:$0xf]
    %v162 = vld [vmem:[%s85 + $0x24] sm:$0xf]
    %v163 = vld [vmem:[%s85 + $0x28] sm:$0xf]
    %v164 = vld [vmem:[%s85 + $0x2c] sm:$0xf]
    %v165 = vld [vmem:[%s85 + $0x30] sm:$0xf]
    %v166 = vld [vmem:[%s85 + $0x34] sm:$0xf]
    %v167 = vld [vmem:[%s85 + $0x38] sm:$0xf]
    %v168 = vld [vmem:[%s85 + $0x3c] sm:$0xf]
    %v169 = vld [vmem:[%s102] sm:$0xf]
    %v170 = vld [vmem:[%s102 + $0x4] sm:$0xf]
    %v171 = vld [vmem:[%s102 + $0x8] sm:$0xf]
    %v172 = vld [vmem:[%s102 + $0xc] sm:$0xf]
    %v173 = vld [vmem:[%s102 + $0x10] sm:$0xf]
    %v174 = vld [vmem:[%s102 + $0x14] sm:$0xf]
    %v175 = vld [vmem:[%s102 + $0x18] sm:$0xf]
    %v176 = vld [vmem:[%s102 + $0x1c] sm:$0xf]
    %v177 = vld [vmem:[%s102 + $0x20] sm:$0xf]
    %v178 = vld [vmem:[%s102 + $0x24] sm:$0xf]
    %v179 = vld [vmem:[%s102 + $0x28] sm:$0xf]
    %v180 = vld [vmem:[%s102 + $0x2c] sm:$0xf]
    %v181 = vld [vmem:[%s102 + $0x30] sm:$0xf]
    %v182 = vld [vmem:[%s102 + $0x34] sm:$0xf]
    %v183 = vld [vmem:[%s102 + $0x38] sm:$0xf]
    %v184 = vld [vmem:[%s102 + $0x3c] sm:$0xf]
    %v201 = vunpack.c.l.b16 %v153
    %v202 = vunpack.c.l.b16 %v154
    %v203 = vunpack.c.l.b16 %v155
    %v204 = vunpack.c.l.b16 %v156
    %v205 = vunpack.c.l.b16 %v157
    %v206 = vunpack.c.l.b16 %v158
    %v207 = vunpack.c.l.b16 %v159
    %v208 = vunpack.c.l.b16 %v160
    %v209 = vunpack.c.l.b16 %v161
    %v210 = vunpack.c.l.b16 %v162
    %v211 = vunpack.c.l.b16 %v163
    %v212 = vunpack.c.l.b16 %v164
    %v213 = vunpack.c.l.b16 %v165
    %v214 = vunpack.c.l.b16 %v166
    %v215 = vunpack.c.l.b16 %v167
    %v216 = vunpack.c.l.b16 %v168
    %v217 = vpack.c.b16 %v202, %v201
    %v218 = vpack.c.b16 %v204, %v203
    %v219 = vpack.c.b16 %v206, %v205
    %v220 = vpack.c.b16 %v208, %v207
    %v221 = vpack.c.b16 %v210, %v209
    %v222 = vpack.c.b16 %v212, %v211
    %v223 = vpack.c.b16 %v214, %v213
    %v224 = vpack.c.b16 %v216, %v215
    %v249 = vunpack.c.l.b16 %v169
    %v250 = vunpack.c.l.b16 %v170
    %v251 = vunpack.c.l.b16 %v171
    %v252 = vunpack.c.l.b16 %v172
    %v253 = vunpack.c.l.b16 %v173
    %v254 = vunpack.c.l.b16 %v174
    %v255 = vunpack.c.l.b16 %v175
    %v256 = vunpack.c.l.b16 %v176
    %v257 = vunpack.c.l.b16 %v177
    %v258 = vunpack.c.l.b16 %v178
    %v259 = vunpack.c.l.b16 %v179
    %v260 = vunpack.c.l.b16 %v180
    %v261 = vunpack.c.l.b16 %v181
    %v262 = vunpack.c.l.b16 %v182
    %v263 = vunpack.c.l.b16 %v183
    %v264 = vunpack.c.l.b16 %v184
    %v265 = vpack.c.b16 %v250, %v249
    %v266 = vpack.c.b16 %v252, %v251
    %v267 = vpack.c.b16 %v254, %v253
    %v268 = vpack.c.b16 %v256, %v255
    %v269 = vpack.c.b16 %v258, %v257
    %v270 = vpack.c.b16 %v260, %v259
    %v271 = vpack.c.b16 %v262, %v261
    %v272 = vpack.c.b16 %v264, %v263
    %281 = vmatprep.subr.bf16.mxu0 0
    %282 = vmatpush1.bf16.msra.mxu0 %v265
    %283 = vmatprep.subr.bf16.mxu0 0
    %284 = vmatpush1.bf16.msra.mxu0 %v266
    %285 = vmatprep.subr.bf16.mxu0 0
    %286 = vmatpush1.bf16.msra.mxu0 %v267
    %287 = vmatprep.subr.bf16.mxu0 0
    %288 = vmatpush1.bf16.msra.mxu0 %v268
    %289 = vmatprep.subr.bf16.mxu0 0
    %290 = vmatpush1.bf16.msra.mxu0 %v269
    %291 = vmatprep.subr.bf16.mxu0 0
    %292 = vmatpush1.bf16.msra.mxu0 %v270
    %293 = vmatprep.subr.bf16.mxu0 0
    %294 = vmatpush1.bf16.msra.mxu0 %v271
    %295 = vmatprep.subr.bf16.mxu0 0
    %296 = vmatpush1.bf16.msra.mxu0 %v272
    %297 = vmatprep.subr.bf16.mxu0 0
    %298 = vmatpush1.bf16.msra.mxu0 0
    %299 = vmatprep.subr.bf16.mxu0 0
    %300 = vmatpush1.bf16.msra.mxu0 0
    %301 = vmatprep.subr.bf16.mxu0 0
    %302 = vmatpush1.bf16.msra.mxu0 0
    %303 = vmatprep.subr.bf16.mxu0 0
    %304 = vmatpush1.bf16.msra.mxu0 0
    %305 = vmatprep.subr.bf16.mxu0 0
    %306 = vmatpush1.bf16.msra.mxu0 0
    %307 = vmatprep.subr.bf16.mxu0 0
    %308 = vmatpush1.bf16.msra.mxu0 0
    %309 = vmatprep.subr.bf16.mxu0 0
    %310 = vmatpush1.bf16.msra.mxu0 0
    %311 = vmatprep.subr.bf16.mxu0 0
    %312 = vmatpush1.bf16.msra.mxu0 0
    %313 = vmatprep.mubr.bf16.mxu0 0
    %314 = vmatmul.mubr.bf16.gmra.mrb[0].mxu0 %v217
    %v315 = vpop.f32.mrb[0].mxu0
    %v316 = vadd.f32 0.0, %v315
    %v317 = vpop.f32.mrb[0].mxu0
    %v318 = vpop.f32.mrb[0].mxu0
    %v319 = vadd.f32 0.0, %v318
    %v320 = vpop.f32.mrb[0].mxu0
    %321 = vmatprep.mubr.bf16.mxu0 0
    %322 = vmatmul.mubr.bf16.gmra.mrb[0].mxu0 %v218
    %v323 = vpop.f32.mrb[0].mxu0
    %v324 = vadd.f32 0.0, %v323
    %v325 = vpop.f32.mrb[0].mxu0
    %v326 = vpop.f32.mrb[0].mxu0
    %v327 = vadd.f32 0.0, %v326
    %v328 = vpop.f32.mrb[0].mxu0
    %329 = vmatprep.mubr.bf16.mxu0 0
    %330 = vmatmul.mubr.bf16.gmra.mrb[0].mxu0 %v219
    %v331 = vpop.f32.mrb[0].mxu0
    %v332 = vadd.f32 0.0, %v331
    %v333 = vpop.f32.mrb[0].mxu0
    %v334 = vpop.f32.mrb[0].mxu0
    %v335 = vadd.f32 0.0, %v334
    %v336 = vpop.f32.mrb[0].mxu0
    %337 = vmatprep.mubr.bf16.mxu0 0
    %338 = vmatmul.mubr.bf16.gmra.mrb[0].mxu0 %v220
    %v339 = vpop.f32.mrb[0].mxu0
    %v340 = vadd.f32 0.0, %v339
    %v341 = vpop.f32.mrb[0].mxu0
    %v342 = vpop.f32.mrb[0].mxu0
    %v343 = vadd.f32 0.0, %v342
    %v344 = vpop.f32.mrb[0].mxu0
    %345 = vmatprep.mubr.bf16.mxu0 0
    %346 = vmatmul.mubr.bf16.gmra.mrb[0].mxu0 %v221
    %v347 = vpop.f32.mrb[0].mxu0
    %v348 = vadd.f32 0.0, %v347
    %v349 = vpop.f32.mrb[0].mxu0
    %v350 = vpop.f32.mrb[0].mxu0
    %v351 = vadd.f32 0.0, %v350
    %v352 = vpop.f32.mrb[0].mxu0
    %353 = vmatprep.mubr.bf16.mxu0 0
    %354 = vmatmul.mubr.bf16.gmra.mrb[0].mxu0 %v222
    %v355 = vpop.f32.mrb[0].mxu0
    %v356 = vadd.f32 0.0, %v355
    %v357 = vpop.f32.mrb[0].mxu0
    %v358 = vpop.f32.mrb[0].mxu0
    %v359 = vadd.f32 0.0, %v358
    %v360 = vpop.f32.mrb[0].mxu0
    %361 = vmatprep.mubr.bf16.mxu0 0
    %362 = vmatmul.mubr.bf16.gmra.mrb[0].mxu0 %v223
    %v363 = vpop.f32.mrb[0].mxu0
    %v364 = vadd.f32 0.0, %v363
    %v365 = vpop.f32.mrb[0].mxu0
    %v366 = vpop.f32.mrb[0].mxu0
    %v367 = vadd.f32 0.0, %v366
    %v368 = vpop.f32.mrb[0].mxu0
    %369 = vmatprep.mubr.bf16.mxu0 0
    %370 = vmatmul.mubr.bf16.gmra.mrb[0].mxu0 %v224
    %v371 = vpop.f32.mrb[0].mxu0
    %v372 = vadd.f32 0.0, %v371
    %v373 = vpop.f32.mrb[0].mxu0
    %v374 = vpop.f32.mrb[0].mxu0
    %v375 = vadd.f32 0.0, %v374
    %v376 = vpop.f32.mrb[0].mxu0
    %377 = vdwg.mxu0
    %v378 = vadd.f32 %v137, %v316
    %v379 = vadd.f32 %v138, %v319
    %v380 = vadd.f32 %v139, %v324
    %v381 = vadd.f32 %v140, %v327
    %v382 = vadd.f32 %v141, %v332
    %v383 = vadd.f32 %v142, %v335
    %v384 = vadd.f32 %v143, %v340
    %v385 = vadd.f32 %v144, %v343
    %v386 = vadd.f32 %v145, %v348
    %v387 = vadd.f32 %v146, %v351
    %v388 = vadd.f32 %v147, %v356
    %v389 = vadd.f32 %v148, %v359
    %v390 = vadd.f32 %v149, %v364
    %v391 = vadd.f32 %v150, %v367
    %v392 = vadd.f32 %v151, %v372
    %v393 = vadd.f32 %v152, %v375
    %vm394 = vcmask 64512
    %395 = vst.msk [vmem:[#allocation2] sm:$0xff] %vm394, %v378
    %396 = vst.msk [vmem:[#allocation2 + $0x8] sm:$0xff] %vm394, %v379
    %397 = vst.msk [vmem:[#allocation2 + $0x10] sm:$0xff] %vm394, %v380
    %398 = vst.msk [vmem:[#allocation2 + $0x18] sm:$0xff] %vm394, %v381
    %399 = vst.msk [vmem:[#allocation2 + $0x20] sm:$0xff] %vm394, %v382
    %400 = vst.msk [vmem:[#allocation2 + $0x28] sm:$0xff] %vm394, %v383
    %401 = vst.msk [vmem:[#allocation2 + $0x30] sm:$0xff] %vm394, %v384
    %402 = vst.msk [vmem:[#allocation2 + $0x38] sm:$0xff] %vm394, %v385
    %403 = vst.msk [vmem:[#allocation2 + $0x40] sm:$0xff] %vm394, %v386
    %404 = vst.msk [vmem:[#allocation2 + $0x48] sm:$0xff] %vm394, %v387
    %405 = vst.msk [vmem:[#allocation2 + $0x50] sm:$0xff] %vm394, %v388
    %406 = vst.msk [vmem:[#allocation2 + $0x58] sm:$0xff] %vm394, %v389
    %407 = vst.msk [vmem:[#allocation2 + $0x60] sm:$0xff] %vm394, %v390
    %408 = vst.msk [vmem:[#allocation2 + $0x68] sm:$0xff] %vm394, %v391
    %409 = vst.msk [vmem:[#allocation2 + $0x70] sm:$0xff] %vm394, %v392
    %410 = vst.msk [vmem:[#allocation2 + $0x78] sm:$0xff] %vm394, %v393
  $region25: #{simple_gcn_forward.1} parent=0 // pred_fallthru
    _
  %s411 = ssub.s32 %s111, 1
  %p412 = scmp.eq.s32.totalorder 0, %s411
  // Predicated region
  $region26: #{simple_gcn_forward.1} parent=0 // pred_check
    %p413 = pneg %p412
  $region27: #{simple_gcn_forward.1} parent=0 // pred_check_branch
    %415 = sbr.rel (%p413) target = $region29
  $region28: #{simple_gcn_forward.1} parent=0 // pred_region
    %v416 = vld [vmem:[#allocation2] sm:$0xff]
    %v417 = vld [vmem:[#allocation2 + $0x8] sm:$0xff]
    %v418 = vld [vmem:[#allocation2 + $0x10] sm:$0xff]
    %v419 = vld [vmem:[#allocation2 + $0x18] sm:$0xff]
    %v420 = vld [vmem:[#allocation2 + $0x20] sm:$0xff]
    %v421 = vld [vmem:[#allocation2 + $0x28] sm:$0xff]
    %v422 = vld [vmem:[#allocation2 + $0x30] sm:$0xff]
    %v423 = vld [vmem:[#allocation2 + $0x38] sm:$0xff]
    %v424 = vld [vmem:[#allocation2 + $0x40] sm:$0xff]
    %v425 = vld [vmem:[#allocation2 + $0x48] sm:$0xff]
    %v426 = vld [vmem:[#allocation2 + $0x50] sm:$0xff]
    %v427 = vld [vmem:[#allocation2 + $0x58] sm:$0xff]
    %v428 = vld [vmem:[#allocation2 + $0x60] sm:$0xff]
    %v429 = vld [vmem:[#allocation2 + $0x68] sm:$0xff]
    %v430 = vld [vmem:[#allocation2 + $0x70] sm:$0xff]
    %v431 = vld [vmem:[#allocation2 + $0x78] sm:$0xff]
    %v432 = vld [vmem:[%s5] sm:$0x1]
    %v434 = vlaneseq
    %v435 = vshrl.u32 %v434, 7
    %v436 = vsub.s32 0, %v435
    %v437 = vrot.slane %v432, %v436
    %v439 = vadd.f32 %v416, %v437
    %v440 = vadd.f32 %v417, %v437
    %v441 = vadd.f32 %v418, %v437
    %v442 = vadd.f32 %v419, %v437
    %v443 = vadd.f32 %v420, %v437
    %v444 = vadd.f32 %v421, %v437
    %v445 = vadd.f32 %v422, %v437
    %v446 = vadd.f32 %v423, %v437
    %v447 = vadd.f32 %v424, %v437
    %v448 = vadd.f32 %v425, %v437
    %v449 = vadd.f32 %v426, %v437
    %v450 = vadd.f32 %v427, %v437
    %v451 = vadd.f32 %v428, %v437
    %v452 = vadd.f32 %v429, %v437
    %v453 = vadd.f32 %v430, %v437
    %v454 = vadd.f32 %v431, %v437
    %v455 = vmax.f32 %v439, 0.0
    %v456 = vmax.f32 %v440, 0.0
    %v457 = vmax.f32 %v441, 0.0
    %v458 = vmax.f32 %v442, 0.0
    %v459 = vmax.f32 %v443, 0.0
    %v460 = vmax.f32 %v444, 0.0
    %v461 = vmax.f32 %v445, 0.0
    %v462 = vmax.f32 %v446, 0.0
    %v463 = vmax.f32 %v447, 0.0
    %v464 = vmax.f32 %v448, 0.0
    %v465 = vmax.f32 %v449, 0.0
    %v466 = vmax.f32 %v450, 0.0
    %v467 = vmax.f32 %v451, 0.0
    %v468 = vmax.f32 %v452, 0.0
    %v469 = vmax.f32 %v453, 0.0
    %v470 = vmax.f32 %v454, 0.0
    %v471 = vld [vmem:[%s4] sm:$0x3]
    %472 = vmatprep.subr.mxu0 0.0
    %473 = vmatpush1.msra.mxu0 %v455
    %474 = vmatprep.subr.mxu0 0.0
    %475 = vmatpush1.msra.mxu0 %v456
    %476 = vmatprep.subr.mxu0 0.0
    %477 = vmatpush1.msra.mxu0 %v457
    %478 = vmatprep.subr.mxu0 0.0
    %479 = vmatpush1.msra.mxu0 %v458
    %480 = vmatprep.subr.mxu0 0.0
    %481 = vmatpush1.msra.mxu0 %v459
    %482 = vmatprep.subr.mxu0 0.0
    %483 = vmatpush1.msra.mxu0 %v460
    %484 = vmatprep.subr.mxu0 0.0
    %485 = vmatpush1.msra.mxu0 %v461
    %486 = vmatprep.subr.mxu0 0.0
    %487 = vmatpush1.msra.mxu0 %v462
    %488 = vmatprep.subr.mxu0 0.0
    %489 = vmatpush1.msra.mxu0 %v463
    %490 = vmatprep.subr.mxu0 0.0
    %491 = vmatpush1.msra.mxu0 %v464
    %492 = vmatprep.subr.mxu0 0.0
    %493 = vmatpush1.msra.mxu0 %v465
    %494 = vmatprep.subr.mxu0 0.0
    %495 = vmatpush1.msra.mxu0 %v466
    %496 = vmatprep.subr.mxu0 0.0
    %497 = vmatpush1.msra.mxu0 %v467
    %498 = vmatprep.subr.mxu0 0.0
    %499 = vmatpush1.msra.mxu0 %v468
    %500 = vmatprep.subr.mxu0 0.0
    %501 = vmatpush1.msra.mxu0 %v469
    %502 = vmatprep.subr.mxu0 0.0
    %503 = vmatpush1.msra.mxu0 %v470
    %504 = vmatprep.subr.mxu0 0.0
    %505 = vmatpush1.msra.mxu0 0.0
    %506 = vmatprep.subr.mxu0 0.0
    %507 = vmatpush1.msra.mxu0 0.0
    %508 = vmatprep.subr.mxu0 0.0
    %509 = vmatpush1.msra.mxu0 0.0
    %510 = vmatprep.subr.mxu0 0.0
    %511 = vmatpush1.msra.mxu0 0.0
    %512 = vmatprep.subr.mxu0 0.0
    %513 = vmatpush1.msra.mxu0 0.0
    %514 = vmatprep.subr.mxu0 0.0
    %515 = vmatpush1.msra.mxu0 0.0
    %516 = vmatprep.subr.mxu0 0.0
    %517 = vmatpush1.msra.mxu0 0.0
    %518 = vmatprep.subr.mxu0 0.0
    %519 = vmatpush1.msra.mxu0 0.0
    %520 = vmatprep.subr.mxu0 0.0
    %521 = vmatpush1.msra.mxu0 0.0
    %522 = vmatprep.subr.mxu0 0.0
    %523 = vmatpush1.msra.mxu0 0.0
    %524 = vmatprep.subr.mxu0 0.0
    %525 = vmatpush1.msra.mxu0 0.0
    %526 = vmatprep.subr.mxu0 0.0
    %527 = vmatpush1.msra.mxu0 0.0
    %528 = vmatprep.subr.mxu0 0.0
    %529 = vmatpush1.msra.mxu0 0.0
    %530 = vmatprep.subr.mxu0 0.0
    %531 = vmatpush1.msra.mxu0 0.0
    %532 = vmatprep.subr.mxu0 0.0
    %533 = vmatpush1.msra.mxu0 0.0
    %534 = vmatprep.subr.mxu0 0.0
    %535 = vmatpush1.msra.mxu0 0.0
    %536 = vmatprep.mubr.f32.mxu0 0.0
    %537 = vmatmul.mubr.f32.gmra.mrb[0].mxu0 %v471
    %v538 = vpop.f32.mrb[0].mxu0
    %v539 = vadd.f32 0.0, %v538
    %v540 = vpop.f32.mrb[0].mxu0
    %541 = vdwg.mxu0
    %vm542 = vcmask 58368
    %543 = vst.msk [vmem:[%s6] sm:$0x3] %vm542, %v539
  $region29: #{simple_gcn_forward.1} parent=0 // pred_fallthru
    _
  // Predicated region
  $region30: #{simple_gcn_forward.1} parent=0 // pred_check
    _
  $region31: #{simple_gcn_forward.1} parent=0 // pred_check_branch
    %545 = sbr.rel (0) target = $region33
  $region32: #{simple_gcn_forward.1} parent=0 // pred_region
    _
  $region33: #{simple_gcn_forward.1} parent=0 // pred_fallthru
    _
  // Predicated region
  $region34: #{simple_gcn_forward.1} parent=0 // pred_check
    _
  $region35: #{simple_gcn_forward.1} parent=0 // pred_check_branch
    %547 = sbr.rel (0) target = $region37
  $region36: #{simple_gcn_forward.1} parent=0 // pred_region
    _
  $region37: #{simple_gcn_forward.1} parent=0 // pred_fallthru
    _

</llo_original>
